<compile_context>
chip_gen: v7x
topology: tpu7x:2x2x1
jax: 0.10.0
libtpu: 0.0.40
codegen_flags: <defaults>
</compile_context>

<pallas_src>
import functools

import jax
import jax.numpy as jnp
from jax.experimental import pallas as pl
from jax.experimental.pallas import tpu as pltpu

SUBLANE = 8


def _round_up(v, m):
    return ((v + m - 1) // m) * m


# --------------------------------------------------------------------------
# Kernel: 3 matmuls + 3 bias-adds + 2 relus on one (tile, f_in) batch slab.
# --------------------------------------------------------------------------
def mlp_kernel(x_ref,
               w1_ref, b1_ref,
               w2_ref, b2_ref,
               w3_ref, b3_ref,
               out_ref):
    bf16 = jnp.bfloat16

    # fc1 (+ folded bn1) + relu
    h = jnp.dot(x_ref[...].astype(bf16), w1_ref[...],
                preferred_element_type=jnp.float32) + b1_ref[...]
    h = jnp.maximum(h, 0.0)

    # fc2 (+ folded bn2) + relu
    h = jnp.dot(h.astype(bf16), w2_ref[...],
                preferred_element_type=jnp.float32) + b2_ref[...]
    h = jnp.maximum(h, 0.0)

    # fc3
    out = jnp.dot(h.astype(bf16), w3_ref[...],
                  preferred_element_type=jnp.float32) + b3_ref[...]
    out_ref[...] = out.astype(out_ref.dtype)


# --------------------------------------------------------------------------
# Parameter construction / preparation
# --------------------------------------------------------------------------
def make_params(key, in_features=25, out_features=2, hidden_features=(20, 20)):
    """Deterministic synthetic parameters (shapes match the PyTorch module)."""
    ks = jax.random.split(key, 16)
    h1, h2 = hidden_features

    def linear_init(kw, kb, fan_in, fan_out):
        bound = 1.0 / jnp.sqrt(fan_in)
        w = jax.random.uniform(kw, (fan_out, fan_in), jnp.float32, -bound, bound)
        b = jax.random.uniform(kb, (fan_out,), jnp.float32, -bound, bound)
        return w, b

    w1, b1 = linear_init(ks[0], ks[1], in_features, h1)
    w2, b2 = linear_init(ks[2], ks[3], h1, h2)
    w3, b3 = linear_init(ks[4], ks[5], h2, out_features)

    def bn_init(kg, kb, km, kv, n):
        gamma = jax.random.uniform(kg, (n,), jnp.float32, 0.5, 1.5)
        beta = jax.random.uniform(kb, (n,), jnp.float32, -0.5, 0.5)
        rmean = jax.random.uniform(km, (n,), jnp.float32, -0.5, 0.5)
        rvar = jax.random.uniform(kv, (n,), jnp.float32, 0.5, 1.5)
        return gamma, beta, rmean, rvar

    bn1 = bn_init(ks[6], ks[7], ks[8], ks[9], h1)
    bn2 = bn_init(ks[10], ks[11], ks[12], ks[13], h2)

    return dict(w1=w1, b1=b1, w2=w2, b2=b2, w3=w3, b3=b3, bn1=bn1, bn2=bn2)


def _fold_bn(gamma, beta, rmean, rvar, eps=1e-5):
    scale = gamma / jnp.sqrt(rvar + eps)
    shift = beta - rmean * scale
    return scale, shift


def prepare_params(params, eps=1e-5):
    """One-time host prep: fold eval-mode BN into the Linears, transpose to
    [in, out] layout, cast weights to bf16 (dot operands); biases stay f32."""
    s1, t1 = _fold_bn(*params["bn1"], eps)
    s2, t2 = _fold_bn(*params["bn2"], eps)
    return dict(
        w1=(params["w1"].T * s1[None, :]).astype(jnp.bfloat16),   # [f_in, h1]
        b1=(params["b1"] * s1 + t1)[None, :].astype(jnp.float32),  # [1, h1]
        w2=(params["w2"].T * s2[None, :]).astype(jnp.bfloat16),   # [h1, h2]
        b2=(params["b2"] * s2 + t2)[None, :].astype(jnp.float32),  # [1, h2]
        w3=params["w3"].T.astype(jnp.bfloat16),                   # [h2, f_out]
        b3=params["b3"][None, :].astype(jnp.float32),              # [1, f_out]
    )


# --------------------------------------------------------------------------
# Fused forward
# --------------------------------------------------------------------------
@functools.partial(jax.jit, static_argnames=("tile_n",))
def mlp_forward(x, folded, tile_n=2048):
    """Fused MLP forward via one pallas_call. Returns (out, [out])."""
    n, f_in = x.shape
    f_out = folded["w3"].shape[1]

    # Pad the batch to a sublane multiple only when needed (rare, tiny pad).
    n_p = _round_up(max(n, SUBLANE), SUBLANE)
    if n_p != n:
        x = jnp.pad(x, ((0, n_p - n), (0, 0)))

    # Batch tile: big (cheap per-step overhead), but capped at ceil(n/2) so the
    # grid has >= 2 steps whenever possible (v7x: both TensorCores busy).
    half = _round_up(pl.cdiv(n_p, 2), SUBLANE)
    tile = max(SUBLANE, min(_round_up(tile_n, SUBLANE), half, n_p))
    grid = (pl.cdiv(n_p, tile),)

    def resident(arr):  # weights/biases: same (full) block every grid step
        return pl.BlockSpec(arr.shape, lambda i: (0, 0))

    out_p = pl.pallas_call(
        mlp_kernel,
        out_shape=jax.ShapeDtypeStruct((n_p, f_out), jnp.float32),
        grid=grid,
        in_specs=[
            # x streams over the batch; full (unpadded) feature dim in HBM.
            pl.BlockSpec((tile, f_in), lambda i: (i, 0)),
            resident(folded["w1"]), resident(folded["b1"]),
            resident(folded["w2"]), resident(folded["b2"]),
            resident(folded["w3"]), resident(folded["b3"]),
        ],
        out_specs=pl.BlockSpec((tile, f_out), lambda i: (i, 0)),
        compiler_params=pltpu.CompilerParams(
            dimension_semantics=("parallel",)),
    )(x, folded["w1"], folded["b1"], folded["w2"], folded["b2"],
      folded["w3"], folded["b3"])

    out = out_p if n_p == n else out_p[:n]
    return out, [out]


# --------------------------------------------------------------------------
# References
# --------------------------------------------------------------------------
def mlp_reference_f32(x, params, eps=1e-5):
    """Pure-JAX f32 reference matching the PyTorch eval-mode forward."""
    s1, t1 = _fold_bn(*params["bn1"], eps)
    s2, t2 = _fold_bn(*params["bn2"], eps)
    h = x @ params["w1"].T + params["b1"]
    h = jnp.maximum(h * s1 + t1, 0.0)
    h = h @ params["w2"].T + params["b2"]
    h = jnp.maximum(h * s2 + t2, 0.0)
    return h @ params["w3"].T + params["b3"]


def mlp_reference_bf16(x, folded):
    """Pure-JAX reference using the same bf16-operand / f32-accumulate dots."""
    bf16 = jnp.bfloat16
    h = jnp.dot(x.astype(bf16), folded["w1"],
                preferred_element_type=jnp.float32) + folded["b1"]
    h = jnp.maximum(h, 0.0)
    h = jnp.dot(h.astype(bf16), folded["w2"],
                preferred_element_type=jnp.float32) + folded["b2"]
    h = jnp.maximum(h, 0.0)
    return jnp.dot(h.astype(bf16), folded["w3"],
                   preferred_element_type=jnp.float32) + folded["b3"]


if __name__ == "__main__":
    key = jax.random.PRNGKey(0)
    k_x, k_p = jax.random.split(key)

    in_features, out_features, hidden = 25, 2, (20, 20)
    batch = 8

    x = jax.random.normal(k_x, (batch, in_features), dtype=jnp.float32)
    params = make_params(k_p, in_features, out_features, hidden)
    folded = prepare_params(params)   # one-time: BN fold + transpose + bf16 cast

    out, y_list = mlp_forward(x, folded)
    out = jax.block_until_ready(out)

    assert out.shape == (batch, out_features)
    assert len(y_list) == 1

    # Tight check vs a reference using the exact same bf16-operand math.
    ref_bf16 = mlp_reference_bf16(x, folded)
    assert jnp.allclose(out, ref_bf16, atol=1e-3, rtol=1e-3)

    # Loose sanity check vs the full-f32 PyTorch-equivalent math
    # (bf16 matmul operands => ~1e-2 level differences expected).
    ref_f32 = mlp_reference_f32(x, params)
    assert jnp.allclose(out, ref_f32, atol=1e-1, rtol=1e-1)

    print("KERNEL_OK")
</pallas_src>

<mosaic_0001>
module attributes {stable_mosaic.version = 11 : i64} {
  func.func @mlp_kernel(%arg0: i32, %arg1: memref<8x25xf32, #tpu.memory_space<vmem>>, %arg2: memref<25x20xbf16, #tpu.memory_space<vmem>>, %arg3: memref<1x20xf32, #tpu.memory_space<vmem>>, %arg4: memref<20x20xbf16, #tpu.memory_space<vmem>>, %arg5: memref<1x20xf32, #tpu.memory_space<vmem>>, %arg6: memref<20x2xbf16, #tpu.memory_space<vmem>>, %arg7: memref<1x2xf32, #tpu.memory_space<vmem>>, %arg8: memref<8x2xf32, #tpu.memory_space<vmem>>) attributes {dimension_semantics = [#tpu.dimension_semantics<parallel>], iteration_bounds = array<i64: 1>, scalar_prefetch = 0 : i64, scratch_operands = 0 : i64, tpu.core_type = #tpu.core_type<tc>, window_params = [{transform_indices = @transform_0, window_bounds = array<i64: 8, 25>}, {pipeline_mode = #tpu.pipeline_mode<synchronous>, transform_indices = @transform_1, window_bounds = array<i64: 25, 20>}, {pipeline_mode = #tpu.pipeline_mode<synchronous>, transform_indices = @transform_2, window_bounds = array<i64: 1, 20>}, {pipeline_mode = #tpu.pipeline_mode<synchronous>, transform_indices = @transform_3, window_bounds = array<i64: 20, 20>}, {pipeline_mode = #tpu.pipeline_mode<synchronous>, transform_indices = @transform_4, window_bounds = array<i64: 1, 20>}, {pipeline_mode = #tpu.pipeline_mode<synchronous>, transform_indices = @transform_5, window_bounds = array<i64: 20, 2>}, {pipeline_mode = #tpu.pipeline_mode<synchronous>, transform_indices = @transform_6, window_bounds = array<i64: 1, 2>}, {transform_indices = @transform_7, window_bounds = array<i64: 8, 2>}]} {
    %c0 = arith.constant 0 : index
    %c0_0 = arith.constant 0 : index
    %0 = vector.load %arg1[%c0, %c0_0] : memref<8x25xf32, #tpu.memory_space<vmem>>, vector<8x25xf32>
    %1 = arith.truncf %0 : vector<8x25xf32> to vector<8x25xbf16>
    %c0_1 = arith.constant 0 : index
    %c0_2 = arith.constant 0 : index
    %2 = vector.load %arg2[%c0_1, %c0_2] : memref<25x20xbf16, #tpu.memory_space<vmem>>, vector<25x20xbf16>
    %cst = arith.constant dense<0.000000e+00> : vector<8x20xf32>
    %3 = tpu.matmul %1, %2, %cst {dimension_numbers = #tpu.dot_dimension_numbers<[1], [0], [0], [1], [0, 0, 1, 1], [], []>} : vector<8x25xbf16>, vector<25x20xbf16>, vector<8x20xf32> -> vector<8x20xf32>
    %c0_3 = arith.constant 0 : index
    %c0_4 = arith.constant 0 : index
    %4 = vector.load %arg3[%c0_3, %c0_4] : memref<1x20xf32, #tpu.memory_space<vmem>>, vector<1x20xf32>
    %5 = vector.broadcast %4 : vector<1x20xf32> to vector<8x20xf32>
    %6 = arith.addf %3, %5 : vector<8x20xf32>
    %cst_5 = arith.constant 0.000000e+00 : f32
    %7 = vector.broadcast %cst_5 : f32 to vector<8x20xf32>
    %8 = arith.maximumf %6, %7 : vector<8x20xf32>
    %9 = arith.truncf %8 : vector<8x20xf32> to vector<8x20xbf16>
    %c0_6 = arith.constant 0 : index
    %c0_7 = arith.constant 0 : index
    %10 = vector.load %arg4[%c0_6, %c0_7] : memref<20x20xbf16, #tpu.memory_space<vmem>>, vector<20x20xbf16>
    %cst_8 = arith.constant dense<0.000000e+00> : vector<8x20xf32>
    %11 = tpu.matmul %9, %10, %cst_8 {dimension_numbers = #tpu.dot_dimension_numbers<[1], [0], [0], [1], [0, 0, 1, 1], [], []>} : vector<8x20xbf16>, vector<20x20xbf16>, vector<8x20xf32> -> vector<8x20xf32>
    %c0_9 = arith.constant 0 : index
    %c0_10 = arith.constant 0 : index
    %12 = vector.load %arg5[%c0_9, %c0_10] : memref<1x20xf32, #tpu.memory_space<vmem>>, vector<1x20xf32>
    %13 = vector.broadcast %12 : vector<1x20xf32> to vector<8x20xf32>
    %14 = arith.addf %11, %13 : vector<8x20xf32>
    %cst_11 = arith.constant 0.000000e+00 : f32
    %15 = vector.broadcast %cst_11 : f32 to vector<8x20xf32>
    %16 = arith.maximumf %14, %15 : vector<8x20xf32>
    %17 = arith.truncf %16 : vector<8x20xf32> to vector<8x20xbf16>
    %c0_12 = arith.constant 0 : index
    %c0_13 = arith.constant 0 : index
    %18 = vector.load %arg6[%c0_12, %c0_13] : memref<20x2xbf16, #tpu.memory_space<vmem>>, vector<20x2xbf16>
    %cst_14 = arith.constant dense<0.000000e+00> : vector<8x2xf32>
    %19 = tpu.matmul %17, %18, %cst_14 {dimension_numbers = #tpu.dot_dimension_numbers<[1], [0], [0], [1], [0, 0, 1, 1], [], []>} : vector<8x20xbf16>, vector<20x2xbf16>, vector<8x2xf32> -> vector<8x2xf32>
    %c0_15 = arith.constant 0 : index
    %c0_16 = arith.constant 0 : index
    %20 = vector.load %arg7[%c0_15, %c0_16] : memref<1x2xf32, #tpu.memory_space<vmem>>, vector<1x2xf32>
    %21 = vector.broadcast %20 : vector<1x2xf32> to vector<8x2xf32>
    %22 = arith.addf %19, %21 : vector<8x2xf32>
    %c0_17 = arith.constant 0 : index
    %c0_18 = arith.constant 0 : index
    %23 = vector.load %arg8[%c0_17, %c0_18] : memref<8x2xf32, #tpu.memory_space<vmem>>, vector<8x2xf32>
    tpu.vector_store %arg8[%c0_17, %c0_18], %22 {strides = array<i32>} : memref<8x2xf32, #tpu.memory_space<vmem>>, vector<8x2xf32>,
    return
  }
  func.func @transform_0(%arg0: i32) -> (i32, i32) {
    %c0_i32 = arith.constant 0 : i32
    %c0_i32_0 = arith.constant 0 : i32
    return %arg0, %c0_i32 : i32, i32
  }
  func.func @transform_1(%arg0: i32) -> (i32, i32) {
    %c0_i32 = arith.constant 0 : i32
    %c0_i32_0 = arith.constant 0 : i32
    %c0_i32_1 = arith.constant 0 : i32
    return %c0_i32, %c0_i32_0 : i32, i32
  }
  func.func @transform_2(%arg0: i32) -> (i32, i32) {
    %c0_i32 = arith.constant 0 : i32
    %c0_i32_0 = arith.constant 0 : i32
    %c0_i32_1 = arith.constant 0 : i32
    return %c0_i32, %c0_i32_0 : i32, i32
  }
  func.func @transform_3(%arg0: i32) -> (i32, i32) {
    %c0_i32 = arith.constant 0 : i32
    %c0_i32_0 = arith.constant 0 : i32
    %c0_i32_1 = arith.constant 0 : i32
    return %c0_i32, %c0_i32_0 : i32, i32
  }
  func.func @transform_4(%arg0: i32) -> (i32, i32) {
    %c0_i32 = arith.constant 0 : i32
    %c0_i32_0 = arith.constant 0 : i32
    %c0_i32_1 = arith.constant 0 : i32
    return %c0_i32, %c0_i32_0 : i32, i32
  }
  func.func @transform_5(%arg0: i32) -> (i32, i32) {
    %c0_i32 = arith.constant 0 : i32
    %c0_i32_0 = arith.constant 0 : i32
    %c0_i32_1 = arith.constant 0 : i32
    return %c0_i32, %c0_i32_0 : i32, i32
  }
  func.func @transform_6(%arg0: i32) -> (i32, i32) {
    %c0_i32 = arith.constant 0 : i32
    %c0_i32_0 = arith.constant 0 : i32
    %c0_i32_1 = arith.constant 0 : i32
    return %c0_i32, %c0_i32_0 : i32, i32
  }
  func.func @transform_7(%arg0: i32) -> (i32, i32) {
    %c0_i32 = arith.constant 0 : i32
    %c0_i32_0 = arith.constant 0 : i32
    return %arg0, %c0_i32 : i32, i32
  }
}

</mosaic_0001>

<llo_original>
// kernel: mlp_forward.1
$region0: #{mlp_forward.1}
  #allocation0 [shape = 'u32[]', space=smem, size = 0x4, offset = 0x4, fixed_abs, tag = 'smem constant byte address 0x4 - core index']
  #allocation1 [shape = 'u32[144,128]{1,0:T(1,128)}', space=vmem, size = 0x12000, scoped, tag = 'internal scratch']
  %s0 = inlined_call_operand.vmem [shape: f32[8,25], index: 0, kind: input, shape index: {}]
  %s1 = inlined_call_operand.vmem [shape: bf16[25,20], index: 1, kind: input, shape index: {}]
  %s2 = inlined_call_operand.vmem [shape: f32[1,20], index: 2, kind: input, shape index: {}]
  %s3 = inlined_call_operand.vmem [shape: bf16[20,20], index: 3, kind: input, shape index: {}]
  %s4 = inlined_call_operand.vmem [shape: f32[1,20], index: 4, kind: input, shape index: {}]
  %s5 = inlined_call_operand.vmem [shape: bf16[20,2], index: 5, kind: input, shape index: {}]
  %s6 = inlined_call_operand.vmem [shape: f32[1,2], index: 6, kind: input, shape index: {}]
  %s7 = inlined_call_operand.vmem [shape: f32[8,2], index: 7, kind: output, shape index: {}]
  %s8 = sld [smem:[#allocation0]]
  $region38: #{mlp_forward.1} parent=0
    _
  %s10 = ssub.s32 1, %s8
  %s11 = scalar_select 0, %s10, %s8
  // Predicated region
  $region2: #{mlp_forward.1} parent=0 // pred_check
    _
  $region3: #{mlp_forward.1} parent=0 // pred_check_branch
    %13 = sbr.rel (0) target = $region5
  $region4: #{mlp_forward.1} parent=0 // pred_region
    _
  $region5: #{mlp_forward.1} parent=0 // pred_fallthru
    _
  // Predicated region
  $region6: #{mlp_forward.1} parent=0 // pred_check
    _
  $region7: #{mlp_forward.1} parent=0 // pred_check_branch
    %15 = sbr.rel (0) target = $region9
  $region8: #{mlp_forward.1} parent=0 // pred_region
    _
  $region9: #{mlp_forward.1} parent=0 // pred_fallthru
    _
  // Predicated region
  $region10: #{mlp_forward.1} parent=0 // pred_check
    _
  $region11: #{mlp_forward.1} parent=0 // pred_check_branch
    %17 = sbr.rel (0) target = $region13
  $region12: #{mlp_forward.1} parent=0 // pred_region
    _
  $region13: #{mlp_forward.1} parent=0 // pred_fallthru
    _
  // Predicated region
  $region14: #{mlp_forward.1} parent=0 // pred_check
    _
  $region15: #{mlp_forward.1} parent=0 // pred_check_branch
    %19 = sbr.rel (0) target = $region17
  $region16: #{mlp_forward.1} parent=0 // pred_region
    _
  $region17: #{mlp_forward.1} parent=0 // pred_fallthru
    _
  // Predicated region
  $region18: #{mlp_forward.1} parent=0 // pred_check
    _
  $region19: #{mlp_forward.1} parent=0 // pred_check_branch
    %21 = sbr.rel (0) target = $region21
  $region20: #{mlp_forward.1} parent=0 // pred_region
    _
  $region21: #{mlp_forward.1} parent=0 // pred_fallthru
    _
  // Predicated region
  $region22: #{mlp_forward.1} parent=0 // pred_check
    _
  $region23: #{mlp_forward.1} parent=0 // pred_check_branch
    %23 = sbr.rel (0) target = $region25
  $region24: #{mlp_forward.1} parent=0 // pred_region
    _
  $region25: #{mlp_forward.1} parent=0 // pred_fallthru
    _
  // Predicated region
  $region26: #{mlp_forward.1} parent=0 // pred_check
    _
  $region27: #{mlp_forward.1} parent=0 // pred_check_branch
    %25 = sbr.rel (0) target = $region29
  $region28: #{mlp_forward.1} parent=0 // pred_region
    _
  $region29: #{mlp_forward.1} parent=0 // pred_fallthru
    _
  %v27 = vld [vmem:[%s0] sm:$0xff]
  %v28 = vpack.c.bf16 %v27, %v27
  %v29 = vld [vmem:[%s1] sm:$0xf]
  %v30 = vld [vmem:[%s1 + $0x4] sm:$0xf]
  %v31 = vld [vmem:[%s1 + $0x8] sm:$0xf]
  %v32 = vld [vmem:[%s1 + $0xc] sm:$0x1]
  %v33 = vld [vmem:[%s2] sm:$0x1]
  %v35 = vlaneseq
  %v36 = vshrl.u32 %v35, 7
  %v37 = vsub.s32 0, %v36
  %v38 = vrot.slane %v33, %v37
  %v44 = vunpack.c.l.b16 %v29
  %v45 = vunpack.c.l.b16 %v30
  %v46 = vunpack.c.l.b16 %v31
  %v47 = vunpack.c.l.b16 %v32
  %v48 = vpack.c.b16 %v45, %v44
  %v49 = vpack.c.b16 %v47, %v46
  %vm51 = vcmask 203776
  %v53 = vsel %vm51, %v28, 0
  %vm55 = vcmask 1043456
  %vm56 = vcmask 1044480
  %v57 = vsel %vm55, 4294967295, 65535
  %v58 = vsel %vm56, %v57, 0
  %v60 = vand.u32 %v49, %v58
  %62 = vmatprep.subr.bf16.mxu0 0
  %63 = vmatpush1.bf16.msra.mxu0 %v48
  %64 = vmatprep.subr.bf16.mxu0 0
  %65 = vmatpush1.bf16.msra.mxu0 %v60
  %66 = vmatprep.subr.bf16.mxu0 0
  %67 = vmatpush1.bf16.msra.mxu0 0
  %68 = vmatprep.subr.bf16.mxu0 0
  %69 = vmatpush1.bf16.msra.mxu0 0
  %70 = vmatprep.subr.bf16.mxu0 0
  %71 = vmatpush1.bf16.msra.mxu0 0
  %72 = vmatprep.subr.bf16.mxu0 0
  %73 = vmatpush1.bf16.msra.mxu0 0
  %74 = vmatprep.subr.bf16.mxu0 0
  %75 = vmatpush1.bf16.msra.mxu0 0
  %76 = vmatprep.subr.bf16.mxu0 0
  %77 = vmatpush1.bf16.msra.mxu0 0
  %78 = vmatprep.subr.bf16.mxu0 0
  %79 = vmatpush1.bf16.msra.mxu0 0
  %80 = vmatprep.subr.bf16.mxu0 0
  %81 = vmatpush1.bf16.msra.mxu0 0
  %82 = vmatprep.subr.bf16.mxu0 0
  %83 = vmatpush1.bf16.msra.mxu0 0
  %84 = vmatprep.subr.bf16.mxu0 0
  %85 = vmatpush1.bf16.msra.mxu0 0
  %86 = vmatprep.subr.bf16.mxu0 0
  %87 = vmatpush1.bf16.msra.mxu0 0
  %88 = vmatprep.subr.bf16.mxu0 0
  %89 = vmatpush1.bf16.msra.mxu0 0
  %90 = vmatprep.subr.bf16.mxu0 0
  %91 = vmatpush1.bf16.msra.mxu0 0
  %92 = vmatprep.subr.bf16.mxu0 0
  %93 = vmatpush1.bf16.msra.mxu0 0
  %94 = vmatprep.mubr.bf16.mxu0 0
  %95 = vmatmul.mubr.bf16.gmra.mrb[0].mxu0 %v53
  %v96 = vpop.f32.mrb[0].mxu0
  %v97 = vadd.f32 %v38, %v96
  %v98 = vpop.f32.mrb[0].mxu0
  %v99 = vpop.f32.mrb[0].mxu0
  %v100 = vpop.f32.mrb[0].mxu0
  %101 = vdwg.mxu0
  %v102 = vmax.f32 %v97, 0.0
  %v103 = vpack.c.bf16 %v102, %v102
  %v104 = vld [vmem:[%s3] sm:$0xf]
  %v105 = vld [vmem:[%s3 + $0x4] sm:$0xf]
  %v106 = vld [vmem:[%s3 + $0x8] sm:$0x3]
  %v107 = vld [vmem:[%s4] sm:$0x1]
  %v109 = vlaneseq
  %v110 = vshrl.u32 %v109, 7
  %v111 = vsub.s32 0, %v110
  %v112 = vrot.slane %v107, %v111
  %v117 = vunpack.c.l.b16 %v104
  %v118 = vunpack.c.l.b16 %v105
  %v119 = vunpack.c.l.b16 %v106
  %v120 = vpack.c.b16 %v118, %v117
  %v121 = vpack.c.b16 %v119, %v119
  %vm123 = vcmask 162816
  %v125 = vsel %vm123, %v103, 0
  %vm127 = vcmask 1041408
  %v129 = vsel %vm127, %v121, 0
  %131 = vmatprep.subr.bf16.mxu0 0
  %132 = vmatpush1.bf16.msra.mxu0 %v120
  %133 = vmatprep.subr.bf16.mxu0 0
  %134 = vmatpush1.bf16.msra.mxu0 %v129
  %135 = vmatprep.subr.bf16.mxu0 0
  %136 = vmatpush1.bf16.msra.mxu0 0
  %137 = vmatprep.subr.bf16.mxu0 0
  %138 = vmatpush1.bf16.msra.mxu0 0
  %139 = vmatprep.subr.bf16.mxu0 0
  %140 = vmatpush1.bf16.msra.mxu0 0
  %141 = vmatprep.subr.bf16.mxu0 0
  %142 = vmatpush1.bf16.msra.mxu0 0
  %143 = vmatprep.subr.bf16.mxu0 0
  %144 = vmatpush1.bf16.msra.mxu0 0
  %145 = vmatprep.subr.bf16.mxu0 0
  %146 = vmatpush1.bf16.msra.mxu0 0
  %147 = vmatprep.subr.bf16.mxu0 0
  %148 = vmatpush1.bf16.msra.mxu0 0
  %149 = vmatprep.subr.bf16.mxu0 0
  %150 = vmatpush1.bf16.msra.mxu0 0
  %151 = vmatprep.subr.bf16.mxu0 0
  %152 = vmatpush1.bf16.msra.mxu0 0
  %153 = vmatprep.subr.bf16.mxu0 0
  %154 = vmatpush1.bf16.msra.mxu0 0
  %155 = vmatprep.subr.bf16.mxu0 0
  %156 = vmatpush1.bf16.msra.mxu0 0
  %157 = vmatprep.subr.bf16.mxu0 0
  %158 = vmatpush1.bf16.msra.mxu0 0
  %159 = vmatprep.subr.bf16.mxu0 0
  %160 = vmatpush1.bf16.msra.mxu0 0
  %161 = vmatprep.subr.bf16.mxu0 0
  %162 = vmatpush1.bf16.msra.mxu0 0
  %163 = vmatprep.mubr.bf16.mxu0 0
  %164 = vmatmul.mubr.bf16.gmra.mrb[0].mxu0 %v125
  %v165 = vpop.f32.mrb[0].mxu0
  %v166 = vadd.f32 %v112, %v165
  %v167 = vpop.f32.mrb[0].mxu0
  %v168 = vpop.f32.mrb[0].mxu0
  %v169 = vpop.f32.mrb[0].mxu0
  %170 = vdwg.mxu0
  %v171 = vmax.f32 %v166, 0.0
  %v172 = vpack.c.bf16 %v171, %v171
  %v173 = vld [vmem:[%s5] sm:$0xf]
  %v174 = vld [vmem:[%s5 + $0x4] sm:$0xf]
  %v175 = vld [vmem:[%s5 + $0x8] sm:$0x3]
  %v176 = vld [vmem:[%s6] sm:$0x1]
  %v178 = vlaneseq
  %v179 = vshrl.u32 %v178, 7
  %v180 = vsub.s32 0, %v179
  %v181 = vrot.slane %v176, %v180
  %v186 = vunpack.c.l.b16 %v173
  %v187 = vunpack.c.l.b16 %v174
  %v188 = vunpack.c.l.b16 %v175
  %v189 = vpack.c.b16 %v187, %v186
  %v190 = vpack.c.b16 %v188, %v188
  %v193 = vsel %vm123, %v172, 0
  %v196 = vsel %vm127, %v190, 0
  %198 = vmatprep.subr.bf16.mxu0 0
  %199 = vmatpush1.bf16.msra.mxu0 %v189
  %200 = vmatprep.subr.bf16.mxu0 0
  %201 = vmatpush1.bf16.msra.mxu0 %v196
  %202 = vmatprep.subr.bf16.mxu0 0
  %203 = vmatpush1.bf16.msra.mxu0 0
  %204 = vmatprep.subr.bf16.mxu0 0
  %205 = vmatpush1.bf16.msra.mxu0 0
  %206 = vmatprep.subr.bf16.mxu0 0
  %207 = vmatpush1.bf16.msra.mxu0 0
  %208 = vmatprep.subr.bf16.mxu0 0
  %209 = vmatpush1.bf16.msra.mxu0 0
  %210 = vmatprep.subr.bf16.mxu0 0
  %211 = vmatpush1.bf16.msra.mxu0 0
  %212 = vmatprep.subr.bf16.mxu0 0
  %213 = vmatpush1.bf16.msra.mxu0 0
  %214 = vmatprep.subr.bf16.mxu0 0
  %215 = vmatpush1.bf16.msra.mxu0 0
  %216 = vmatprep.subr.bf16.mxu0 0
  %217 = vmatpush1.bf16.msra.mxu0 0
  %218 = vmatprep.subr.bf16.mxu0 0
  %219 = vmatpush1.bf16.msra.mxu0 0
  %220 = vmatprep.subr.bf16.mxu0 0
  %221 = vmatpush1.bf16.msra.mxu0 0
  %222 = vmatprep.subr.bf16.mxu0 0
  %223 = vmatpush1.bf16.msra.mxu0 0
  %224 = vmatprep.subr.bf16.mxu0 0
  %225 = vmatpush1.bf16.msra.mxu0 0
  %226 = vmatprep.subr.bf16.mxu0 0
  %227 = vmatpush1.bf16.msra.mxu0 0
  %228 = vmatprep.subr.bf16.mxu0 0
  %229 = vmatpush1.bf16.msra.mxu0 0
  %230 = vmatprep.mubr.bf16.mxu0 0
  %231 = vmatmul.mubr.bf16.gmra.mrb[0].mxu0 %v193
  %v232 = vpop.f32.mrb[0].mxu0
  %v233 = vadd.f32 %v181, %v232
  %v234 = vpop.f32.mrb[0].mxu0
  %v235 = vpop.f32.mrb[0].mxu0
  %v236 = vpop.f32.mrb[0].mxu0
  %237 = vdwg.mxu0
  %vm238 = vcmask 15360
  %239 = vst.msk [vmem:[%s7] sm:$0xff] %vm238, %v233
  // Predicated region
  $region30: #{mlp_forward.1} parent=0 // pred_check
    _
  $region31: #{mlp_forward.1} parent=0 // pred_check_branch
    %241 = sbr.rel (0) target = $region33
  $region32: #{mlp_forward.1} parent=0 // pred_region
    _
  $region33: #{mlp_forward.1} parent=0 // pred_fallthru
    _
  // Predicated region
  $region34: #{mlp_forward.1} parent=0 // pred_check
    _
  $region35: #{mlp_forward.1} parent=0 // pred_check_branch
    %243 = sbr.rel (0) target = $region37
  $region36: #{mlp_forward.1} parent=0 // pred_region
    _
  $region37: #{mlp_forward.1} parent=0 // pred_fallthru
    _

</llo_original>
